<compile_context>
chip_gen: v6e
topology: v6e:2x2x1
jax: 0.10.0
libtpu: 0.0.40
codegen_flags: <defaults>
</compile_context>

<pallas_src>
import math

import jax
import jax.numpy as jnp
from jax.experimental import pallas as pl
from jax.experimental.pallas import tpu as pltpu

_EPS = 2.220446049250313e-16          # np.finfo(float).eps
_SOFTPLUS_THRESHOLD = 20.0            # torch default softplus threshold


def _round_up(n, m):
    return ((n + m - 1) // m) * m


def _mdn_kernel(x_ref, wpi_ref, wmu_ref, wsig_ref, pi_ref, mu_ref, sig_ref):
    # Clamp input from below (torch.clamp(x, eps) only clamps the min).
    x = jnp.maximum(x_ref[...], jnp.float32(_EPS))

    # ---- pi head: matmul + numerically-stable softmax over last axis ----
    logits = jnp.dot(x, wpi_ref[...], preferred_element_type=jnp.float32)
    m = jnp.max(logits, axis=-1, keepdims=True)
    e = jnp.exp(logits - m)
    denom = jnp.sum(e, axis=-1, keepdims=True)
    # EUP approximate reciprocal + one Newton refinement (VALU) -> ~f32 accuracy
    r = pl.reciprocal(denom, approx=True)
    r = r * (jnp.float32(2.0) - denom * r)
    pi_ref[...] = e * r

    # ---- mu head: plain matmul (lane-dense (TM, D*C) store) ----
    mu_ref[...] = jnp.dot(x, wmu_ref[...], preferred_element_type=jnp.float32)

    # ---- sigma_sq head: matmul + softplus (torch semantics: linear above threshold) ----
    s = jnp.dot(x, wsig_ref[...], preferred_element_type=jnp.float32)
    sp = jnp.log1p(jnp.exp(jnp.minimum(s, _SOFTPLUS_THRESHOLD)))
    sig_ref[...] = jnp.where(s > _SOFTPLUS_THRESHOLD, s, sp)


def mdn_forward(x, w_pi, w_mu, w_sigma, *, block_m=1024):
    """x: (B, S, D); w_pi: (C, D); w_mu, w_sigma: (D*C, D) — PyTorch Linear layout."""
    B, S, D = x.shape
    C = w_pi.shape[0]
    M = B * S

    # Tile size along the token axis: multiple of 8, capped at block_m,
    # never larger than the (padded) problem.
    tm = min(block_m, _round_up(M, 8))
    m_pad = _round_up(M, tm)

    x2 = x.reshape(M, D).astype(jnp.float32)
    if m_pad != M:
        # Pad with zeros; padded rows produce finite garbage that is sliced off.
        x2 = jnp.pad(x2, ((0, m_pad - M), (0, 0)))

    # Pre-transpose weights so the kernel does x @ W (MXU-friendly).
    wpi_t = jnp.asarray(w_pi, jnp.float32).T      # (D, C)
    wmu_t = jnp.asarray(w_mu, jnp.float32).T      # (D, D*C)
    wsig_t = jnp.asarray(w_sigma, jnp.float32).T  # (D, D*C)

    grid = (m_pad // tm,)

    pi2, mu2, sig2 = pl.pallas_call(
        _mdn_kernel,
        out_shape=(
            jax.ShapeDtypeStruct((m_pad, C), jnp.float32),
            jax.ShapeDtypeStruct((m_pad, D * C), jnp.float32),
            jax.ShapeDtypeStruct((m_pad, D * C), jnp.float32),
        ),
        grid=grid,
        in_specs=[
            pl.BlockSpec((tm, D), lambda i: (i, 0)),          # x tile, streamed
            pl.BlockSpec((D, C), lambda i: (0, 0)),           # weights: VMEM-resident
            pl.BlockSpec((D, D * C), lambda i: (0, 0)),
            pl.BlockSpec((D, D * C), lambda i: (0, 0)),
        ],
        out_specs=(
            pl.BlockSpec((tm, C), lambda i: (i, 0)),
            pl.BlockSpec((tm, D * C), lambda i: (i, 0)),
            pl.BlockSpec((tm, D * C), lambda i: (i, 0)),
        ),
        compiler_params=pltpu.CompilerParams(
            dimension_semantics=("parallel",)),               # megacore on v7x
    )(x2, wpi_t, wmu_t, wsig_t)

    pi = pi2[:M].reshape(B, S, C)
    mu = mu2[:M].reshape(B, S, D, C)
    sigma_sq = sig2[:M].reshape(B, S, D, C)
    return pi, mu, sigma_sq


def _init_linear_weight(key, out_features, in_features):
    """Deterministic init matching nn.Linear's kaiming-uniform bound (U[-1/sqrt(fan_in), +])."""
    bound = 1.0 / math.sqrt(in_features)
    return jax.random.uniform(
        key, (out_features, in_features), jnp.float32, minval=-bound, maxval=bound)


def _reference(x, w_pi, w_mu, w_sigma):
    B, S, D = x.shape
    C = w_pi.shape[0]
    xc = jnp.maximum(x, _EPS)
    pi = jax.nn.softmax(xc @ w_pi.T, axis=-1)
    mu = (xc @ w_mu.T).reshape(B, S, D, C)
    sig = jax.nn.softplus(xc @ w_sigma.T).reshape(B, S, D, C)
    return pi, mu, sig


def _check(x, w_pi, w_mu, w_sigma, block_m=1024):
    B, S, D = x.shape
    C = w_pi.shape[0]
    pi, mu, sigma_sq = mdn_forward(x, w_pi, w_mu, w_sigma, block_m=block_m)
    jax.block_until_ready((pi, mu, sigma_sq))
    pi_r, mu_r, sig_r = _reference(x, w_pi, w_mu, w_sigma)
    assert pi.shape == (B, S, C) and mu.shape == (B, S, D, C) and sigma_sq.shape == (B, S, D, C)
    assert jnp.allclose(pi, pi_r, atol=1e-5, rtol=1e-5)
    assert jnp.allclose(mu, mu_r, atol=1e-5, rtol=1e-5)
    assert jnp.allclose(sigma_sq, sig_r, atol=1e-5, rtol=1e-5)


if __name__ == "__main__":
    # Small shapes consistent with the module: input_dim = out_dim = layer_size = 32, coefs = 8.
    B, S, D, C = 2, 8, 32, 8

    key = jax.random.PRNGKey(0)
    kx, kpi, kmu, ksig = jax.random.split(key, 4)

    w_pi = _init_linear_weight(kpi, C, D)          # (coefs, layer_size)
    w_mu = _init_linear_weight(kmu, D * C, D)      # (out_dim*coefs, layer_size)
    w_sigma = _init_linear_weight(ksig, D * C, D)  # (out_dim*coefs, layer_size)

    # 1) Tiny shape (single tile).
    x_small = jax.random.normal(kx, (B, S, D), jnp.float32)
    _check(x_small, w_pi, w_mu, w_sigma)

    # 2) Larger token count that exercises multi-tile + padding (M=1200, TM=256 -> grid=5, pad to 1280).
    x_big = jax.random.normal(jax.random.PRNGKey(1), (4, 300, D), jnp.float32)
    _check(x_big, w_pi, w_mu, w_sigma, block_m=256)

    print("KERNEL_OK")
</pallas_src>

<mosaic_0001>
module attributes {stable_mosaic.version = 11 : i64} {
  func.func @_mdn_kernel(%arg0: i32, %arg1: memref<16x32xf32, #tpu.memory_space<vmem>>, %arg2: memref<32x8xf32, #tpu.memory_space<vmem>>, %arg3: memref<32x256xf32, #tpu.memory_space<vmem>>, %arg4: memref<32x256xf32, #tpu.memory_space<vmem>>, %arg5: memref<16x8xf32, #tpu.memory_space<vmem>>, %arg6: memref<16x256xf32, #tpu.memory_space<vmem>>, %arg7: memref<16x256xf32, #tpu.memory_space<vmem>>) attributes {dimension_semantics = [#tpu.dimension_semantics<parallel>], iteration_bounds = array<i64: 1>, scalar_prefetch = 0 : i64, scratch_operands = 0 : i64, tpu.core_type = #tpu.core_type<tc>, window_params = [{transform_indices = @transform_0, window_bounds = array<i64: 16, 32>}, {pipeline_mode = #tpu.pipeline_mode<synchronous>, transform_indices = @transform_1, window_bounds = array<i64: 32, 8>}, {pipeline_mode = #tpu.pipeline_mode<synchronous>, transform_indices = @transform_2, window_bounds = array<i64: 32, 256>}, {pipeline_mode = #tpu.pipeline_mode<synchronous>, transform_indices = @transform_3, window_bounds = array<i64: 32, 256>}, {transform_indices = @transform_4, window_bounds = array<i64: 16, 8>}, {transform_indices = @transform_5, window_bounds = array<i64: 16, 256>}, {transform_indices = @transform_6, window_bounds = array<i64: 16, 256>}]} {
    %c0 = arith.constant 0 : index
    %c0_0 = arith.constant 0 : index
    %0 = vector.load %arg1[%c0, %c0_0] : memref<16x32xf32, #tpu.memory_space<vmem>>, vector<16x32xf32>
    %cst = arith.constant 2.22044605E-16 : f32
    %1 = vector.broadcast %cst : f32 to vector<16x32xf32>
    %2 = arith.maximumf %0, %1 : vector<16x32xf32>
    %c0_1 = arith.constant 0 : index
    %c0_2 = arith.constant 0 : index
    %3 = vector.load %arg2[%c0_1, %c0_2] : memref<32x8xf32, #tpu.memory_space<vmem>>, vector<32x8xf32>
    %cst_3 = arith.constant dense<0.000000e+00> : vector<16x8xf32>
    %4 = tpu.matmul %2, %3, %cst_3 {dimension_numbers = #tpu.dot_dimension_numbers<[1], [0], [0], [1], [0, 0, 1, 1], [], []>} : vector<16x32xf32>, vector<32x8xf32>, vector<16x8xf32> -> vector<16x8xf32>
    %cst_4 = arith.constant dense<0xFF800000> : vector<16xf32>
    %5 = vector.multi_reduction <maximumf>, %4, %cst_4 [1] : vector<16x8xf32> to vector<16xf32>
    %6 = vector.shape_cast %5 : vector<16xf32> to vector<16x1xf32>
    %7 = vector.broadcast %6 : vector<16x1xf32> to vector<16x8xf32>
    %8 = arith.subf %4, %7 : vector<16x8xf32>
    %9 = math.exp %8 : vector<16x8xf32>
    %cst_5 = arith.constant dense<0.000000e+00> : vector<16xf32>
    %10 = vector.multi_reduction <add>, %9, %cst_5 [1] : vector<16x8xf32> to vector<16xf32>
    %11 = vector.shape_cast %10 : vector<16xf32> to vector<16x1xf32>
    %12 = tpu.reciprocal %11 {approx = true} : vector<16x1xf32> -> vector<16x1xf32>
    %13 = arith.mulf %11, %12 : vector<16x1xf32>
    %cst_6 = arith.constant 2.000000e+00 : f32
    %14 = vector.broadcast %cst_6 : f32 to vector<16x1xf32>
    %15 = arith.subf %14, %13 : vector<16x1xf32>
    %16 = arith.mulf %12, %15 : vector<16x1xf32>
    %17 = vector.broadcast %16 : vector<16x1xf32> to vector<16x8xf32>
    %18 = arith.mulf %9, %17 : vector<16x8xf32>
    %c0_7 = arith.constant 0 : index
    %c0_8 = arith.constant 0 : index
    %19 = vector.load %arg5[%c0_7, %c0_8] : memref<16x8xf32, #tpu.memory_space<vmem>>, vector<16x8xf32>
    tpu.vector_store %arg5[%c0_7, %c0_8], %18 {strides = array<i32>} : memref<16x8xf32, #tpu.memory_space<vmem>>, vector<16x8xf32>,
    %c0_9 = arith.constant 0 : index
    %c0_10 = arith.constant 0 : index
    %20 = vector.load %arg3[%c0_9, %c0_10] : memref<32x256xf32, #tpu.memory_space<vmem>>, vector<32x256xf32>
    %cst_11 = arith.constant dense<0.000000e+00> : vector<16x256xf32>
    %21 = tpu.matmul %2, %20, %cst_11 {dimension_numbers = #tpu.dot_dimension_numbers<[1], [0], [0], [1], [0, 0, 1, 1], [], []>} : vector<16x32xf32>, vector<32x256xf32>, vector<16x256xf32> -> vector<16x256xf32>
    %c0_12 = arith.constant 0 : index
    %c0_13 = arith.constant 0 : index
    %22 = vector.load %arg6[%c0_12, %c0_13] : memref<16x256xf32, #tpu.memory_space<vmem>>, vector<16x256xf32>
    tpu.vector_store %arg6[%c0_12, %c0_13], %21 {strides = array<i32>} : memref<16x256xf32, #tpu.memory_space<vmem>>, vector<16x256xf32>,
    %c0_14 = arith.constant 0 : index
    %c0_15 = arith.constant 0 : index
    %23 = vector.load %arg4[%c0_14, %c0_15] : memref<32x256xf32, #tpu.memory_space<vmem>>, vector<32x256xf32>
    %cst_16 = arith.constant dense<0.000000e+00> : vector<16x256xf32>
    %24 = tpu.matmul %2, %23, %cst_16 {dimension_numbers = #tpu.dot_dimension_numbers<[1], [0], [0], [1], [0, 0, 1, 1], [], []>} : vector<16x32xf32>, vector<32x256xf32>, vector<16x256xf32> -> vector<16x256xf32>
    %cst_17 = arith.constant 2.000000e+01 : f32
    %25 = vector.broadcast %cst_17 : f32 to vector<16x256xf32>
    %26 = arith.minimumf %24, %25 : vector<16x256xf32>
    %27 = math.exp %26 : vector<16x256xf32>
    %28 = math.log1p %27 : vector<16x256xf32>
    %cst_18 = arith.constant 2.000000e+01 : f32
    %29 = vector.broadcast %cst_18 : f32 to vector<16x256xf32>
    %30 = arith.cmpf ogt, %24, %29 : vector<16x256xf32>
    %31 = arith.select %30, %24, %28 : vector<16x256xi1>, vector<16x256xf32>
    %c0_19 = arith.constant 0 : index
    %c0_20 = arith.constant 0 : index
    %32 = vector.load %arg7[%c0_19, %c0_20] : memref<16x256xf32, #tpu.memory_space<vmem>>, vector<16x256xf32>
    tpu.vector_store %arg7[%c0_19, %c0_20], %31 {strides = array<i32>} : memref<16x256xf32, #tpu.memory_space<vmem>>, vector<16x256xf32>,
    return
  }
  func.func @transform_0(%arg0: i32) -> (i32, i32) {
    %c0_i32 = arith.constant 0 : i32
    %c0_i32_0 = arith.constant 0 : i32
    return %arg0, %c0_i32 : i32, i32
  }
  func.func @transform_1(%arg0: i32) -> (i32, i32) {
    %c0_i32 = arith.constant 0 : i32
    %c0_i32_0 = arith.constant 0 : i32
    %c0_i32_1 = arith.constant 0 : i32
    return %c0_i32, %c0_i32_0 : i32, i32
  }
  func.func @transform_2(%arg0: i32) -> (i32, i32) {
    %c0_i32 = arith.constant 0 : i32
    %c0_i32_0 = arith.constant 0 : i32
    %c0_i32_1 = arith.constant 0 : i32
    return %c0_i32, %c0_i32_0 : i32, i32
  }
  func.func @transform_3(%arg0: i32) -> (i32, i32) {
    %c0_i32 = arith.constant 0 : i32
    %c0_i32_0 = arith.constant 0 : i32
    %c0_i32_1 = arith.constant 0 : i32
    return %c0_i32, %c0_i32_0 : i32, i32
  }
  func.func @transform_4(%arg0: i32) -> (i32, i32) {
    %c0_i32 = arith.constant 0 : i32
    %c0_i32_0 = arith.constant 0 : i32
    return %arg0, %c0_i32 : i32, i32
  }
  func.func @transform_5(%arg0: i32) -> (i32, i32) {
    %c0_i32 = arith.constant 0 : i32
    %c0_i32_0 = arith.constant 0 : i32
    return %arg0, %c0_i32 : i32, i32
  }
  func.func @transform_6(%arg0: i32) -> (i32, i32) {
    %c0_i32 = arith.constant 0 : i32
    %c0_i32_0 = arith.constant 0 : i32
    return %arg0, %c0_i32 : i32, i32
  }
}

</mosaic_0001>

<llo_original>
// kernel: tpu_custom_call.1
$region0: #{tpu_custom_call.1}
  #allocation0 [shape = 'u32[]', space=smem, size = 0x4, offset = 0x4, fixed_abs, tag = 'smem constant byte address 0x4 - core index']
  #allocation1 [shape = 'u32[144,128]{1,0:T(1,128)}', space=vmem, size = 0x12000, scoped, tag = 'internal scratch']
  %s0 = inlined_call_operand.vmem [shape: f32[16,32], index: 0, kind: input, shape index: {}]
  %s1 = inlined_call_operand.vmem [shape: f32[32,8], index: 1, kind: input, shape index: {}]
  %s2 = inlined_call_operand.hbm [shape: f32[32,256], index: 2, kind: input, shape index: {}]
  %s3 = inlined_call_operand.hbm [shape: f32[32,256], index: 3, kind: input, shape index: {}]
  %s4 = inlined_call_operand.vmem [shape: f32[16,8], index: 4, kind: output, shape index: {0}]
  %s5 = inlined_call_operand.hbm [shape: f32[16,256], index: 5, kind: output, shape index: {1}]
  %s6 = inlined_call_operand.hbm [shape: f32[16,256], index: 6, kind: output, shape index: {2}]
  %7 = xla_tuple %s4, %s5, %s6
  %s8 = sld [smem:[#allocation0]]
  $region50: #{tpu_custom_call.1} parent=0
    _
  %s10 = ssub.s32 1, %s8
  %s11 = scalar_select 0, %s10, %s8
  $region1: #{tpu_custom_call.1} parent=0
    #allocation2 [shape = 'u8[32768]{0}', space=vmem, size = 0x8000, scoped, tag = 'input window, operand 2, single buffered']
    #allocation3 [shape = 's32[1]{0}', space=sflag, size = 0x4, scoped, tag = 'scoped memory for tpu_custom_call.1']
    #allocation4 [shape = 's32[1]{0}', space=sflag, size = 0x4, scoped, tag = 'scoped memory for tpu_custom_call.1']
    #allocation5 [shape = 'u8[32768]{0}', space=vmem, size = 0x8000, scoped, tag = 'input window, operand 3, single buffered']
    #allocation6 [shape = 's32[1]{0}', space=sflag, size = 0x4, scoped, tag = 'scoped memory for tpu_custom_call.1']
    #allocation7 [shape = 'u8[16384]{0}', space=vmem, size = 0x4000, scoped, tag = 'output window, operand 1, single buffered']
    #allocation8 [shape = 'u8[16384]{0}', space=vmem, size = 0x4000, scoped, tag = 'output window, operand 2, single buffered']
    #allocation9 [shape = 's32[1]{0}', space=sflag, size = 0x4, scoped, tag = 'scoped memory for tpu_custom_call.1']
    %12 = vsyncpa [#allocation3], 0
    %13 = vsyncpa [#allocation6], 0
    %14 = vsyncpa [#allocation4], 0
    %15 = vsyncpa [#allocation9], 0
    // Predicated region
    $region2: #{tpu_custom_call.1} parent=1 // pred_check
      _
    $region3: #{tpu_custom_call.1} parent=1 // pred_check_branch
      %17 = sbr.rel (0) target = $region5
    $region4: #{tpu_custom_call.1} parent=1 // pred_region
      _
    $region5: #{tpu_custom_call.1} parent=1 // pred_fallthru
      _
    // Predicated region
    $region6: #{tpu_custom_call.1} parent=1 // pred_check
      _
    $region7: #{tpu_custom_call.1} parent=1 // pred_check_branch
      %19 = sbr.rel (0) target = $region9
    $region8: #{tpu_custom_call.1} parent=1 // pred_region
      _
    $region9: #{tpu_custom_call.1} parent=1 // pred_fallthru
      _
    // Predicated region
    $region10: #{tpu_custom_call.1} parent=1 // pred_check
      _
    $region11: #{tpu_custom_call.1} parent=1 // pred_check_branch
      %21 = sbr.rel (0) target = $region13
    $region12: #{tpu_custom_call.1} parent=1 // pred_region
      %s23 = ssub.s32 1024, 1024
      %24 = vsyncadd [#allocation3], %s23
      %s25 = sshll.u32 [#allocation2], 4
      %s26 = int_to_ptr.vmem [resolvable:$true] %s25
      %31 = dma.hbm_to_vmem [thread:$0]  %s2, 1024, %s26, [#allocation3], 256, 256, 16
    $region13: #{tpu_custom_call.1} parent=1 // pred_fallthru
      _
    // Predicated region
    $region14: #{tpu_custom_call.1} parent=1 // pred_check
      _
    $region15: #{tpu_custom_call.1} parent=1 // pred_check_branch
      %33 = sbr.rel (0) target = $region17
    $region16: #{tpu_custom_call.1} parent=1 // pred_region
      %s35 = ssub.s32 1024, 1024
      %36 = vsyncadd [#allocation6], %s35
      %s37 = sshll.u32 [#allocation5], 4
      %s38 = int_to_ptr.vmem [resolvable:$true] %s37
      %43 = dma.hbm_to_vmem [thread:$0]  %s3, 1024, %s38, [#allocation6], 256, 256, 16
    $region17: #{tpu_custom_call.1} parent=1 // pred_fallthru
      _
    // Predicated region
    $region18: #{tpu_custom_call.1} parent=1 // pred_check
      _
    $region19: #{tpu_custom_call.1} parent=1 // pred_check_branch
      %45 = sbr.rel (0) target = $region21
    $region20: #{tpu_custom_call.1} parent=1 // pred_region
      %46 = dma.done [#allocation3], 1024
    $region21: #{tpu_custom_call.1} parent=1 // pred_fallthru
      _
    // Predicated region
    $region22: #{tpu_custom_call.1} parent=1 // pred_check
      _
    $region23: #{tpu_custom_call.1} parent=1 // pred_check_branch
      %48 = sbr.rel (0) target = $region25
    $region24: #{tpu_custom_call.1} parent=1 // pred_region
      %49 = dma.done [#allocation6], 1024
    $region25: #{tpu_custom_call.1} parent=1 // pred_fallthru
      _
    %v50 = vld [vmem:[%s0] sm:$0xff]
    %v51 = vld [vmem:[%s0 + $0x8] sm:$0xff]
    %v52 = vmax.f32 %v50, 2.220446e-16
    %v53 = vmax.f32 %v51, 2.220446e-16
    %v54 = vld [vmem:[%s1] sm:$0xff]
    %v55 = vld [vmem:[%s1 + $0x8] sm:$0xff]
    %v56 = vld [vmem:[%s1 + $0x10] sm:$0xff]
    %v57 = vld [vmem:[%s1 + $0x18] sm:$0xff]
    %vm58 = vcmask 261120
    %v60 = vsel %vm58, %v52, 0
    %v63 = vsel %vm58, %v53, 0
    %65 = vmatprep.subr.mxu0 0.0
    %66 = vmatpush1.msra.mxu0 0.0
    %67 = vmatprep.subr.mxu0 0.0
    %68 = vmatpush1.msra.mxu0 0.0
    %69 = vmatprep.subr.mxu0 0.0
    %70 = vmatpush1.msra.mxu0 0.0
    %71 = vmatprep.subr.mxu0 0.0
    %72 = vmatpush1.msra.mxu0 0.0
    %73 = vmatprep.subr.mxu0 0.0
    %74 = vmatpush1.msra.mxu0 0.0
    %75 = vmatprep.subr.mxu0 0.0
    %76 = vmatpush1.msra.mxu0 0.0
    %77 = vmatprep.subr.mxu0 0.0
    %78 = vmatpush1.msra.mxu0 0.0
    %79 = vmatprep.subr.mxu0 0.0
    %80 = vmatpush1.msra.mxu0 0.0
    %81 = vmatprep.subr.mxu0 0.0
    %82 = vmatpush1.msra.mxu0 0.0
    %83 = vmatprep.subr.mxu0 0.0
    %84 = vmatpush1.msra.mxu0 0.0
    %85 = vmatprep.subr.mxu0 0.0
    %86 = vmatpush1.msra.mxu0 0.0
    %87 = vmatprep.subr.mxu0 0.0
    %88 = vmatpush1.msra.mxu0 0.0
    %89 = vmatprep.subr.mxu0 0.0
    %90 = vmatpush1.msra.mxu0 %v57
    %91 = vmatprep.subr.mxu0 0.0
    %92 = vmatpush1.msra.mxu0 %v56
    %93 = vmatprep.subr.mxu0 0.0
    %94 = vmatpush1.msra.mxu0 %v55
    %95 = vmatprep.subr.mxu0 0.0
    %96 = vmatpush1.msra.mxu0 %v54
    %97 = vmatprep.subr.mxu0 0.0
    %98 = vmatpush2.msra.mxu0 0.0
    %99 = vmatprep.subr.mxu0 0.0
    %100 = vmatpush2.msra.mxu0 0.0
    %101 = vmatprep.subr.mxu0 0.0
    %102 = vmatpush2.msra.mxu0 0.0
    %103 = vmatprep.subr.mxu0 0.0
    %104 = vmatpush2.msra.mxu0 0.0
    %105 = vmatprep.subr.mxu0 0.0
    %106 = vmatpush2.msra.mxu0 0.0
    %107 = vmatprep.subr.mxu0 0.0
    %108 = vmatpush2.msra.mxu0 0.0
    %109 = vmatprep.subr.mxu0 0.0
    %110 = vmatpush2.msra.mxu0 0.0
    %111 = vmatprep.subr.mxu0 0.0
    %112 = vmatpush2.msra.mxu0 0.0
    %113 = vmatprep.subr.mxu0 0.0
    %114 = vmatpush2.msra.mxu0 0.0
    %115 = vmatprep.subr.mxu0 0.0
    %116 = vmatpush2.msra.mxu0 0.0
    %117 = vmatprep.subr.mxu0 0.0
    %118 = vmatpush2.msra.mxu0 0.0
    %119 = vmatprep.subr.mxu0 0.0
    %120 = vmatpush2.msra.mxu0 0.0
    %121 = vmatprep.subr.mxu0 0.0
    %122 = vmatpush2.msra.mxu0 0.0
    %123 = vmatprep.subr.mxu0 0.0
    %124 = vmatpush2.msra.mxu0 0.0
    %125 = vmatprep.subr.mxu0 0.0
    %126 = vmatpush2.msra.mxu0 0.0
    %127 = vmatprep.subr.mxu0 0.0
    %128 = vmatpush2.msra.mxu0 0.0
    %129 = vmatprep.mubr.f32.mxu0 0.0
    %130 = vmatmul.mubr.f32.gmra.mxu0 %v60
    %v131 = vpop.f32.mrf.mxu0
    %v132 = vadd.f32 0.0, %v131
    %v133 = vpop.f32.mrf.mxu0
    %134 = vmatprep.mubr.f32.mxu0 0.0
    %135 = vmatmul.mubr.f32.gmra.mxu0 %v63
    %v136 = vpop.f32.mrf.mxu0
    %v137 = vadd.f32 0.0, %v136
    %v138 = vpop.f32.mrf.mxu0
    %139 = vdwg.mxu0
    %vm140 = vcmask 64512
    %v141 = vsel %vm140, %v132, -inf
    %142 = vmax.xlane.f32.xlu0 %v141
    %v143 = vpop.xlane.xlu0 %142
    %v144 = vsel %vm140, %v137, -inf
    %145 = vmax.xlane.f32.xlu0 %v144
    %v146 = vpop.xlane.xlu0 %145
    %v147 = vsub.f32 %v132, %v143
    %v148 = vsub.f32 %v137, %v146
    %v149 = vmul.f32 %v147, 1.442695
    %v150 = vpow.pop %v149
    %v151 = vmul.f32 %v148, 1.442695
    %v152 = vpow.pop %v151
    %v153 = vsel %vm140, %v150, 0.0
    %154 = vadd.xlane.f32.xlu0 %v153
    %v155 = vpop.xlane.xlu0 %154
    %v156 = vsel %vm140, %v152, 0.0
    %157 = vadd.xlane.f32.xlu0 %v156
    %v158 = vpop.xlane.xlu0 %157
    %v159 = vrcp.pop %v155
    %v160 = vrcp.pop %v158
    %v161 = vmul.f32 %v155, %v159
    %v162 = vmul.f32 %v158, %v160
    %v163 = vsub.f32 2.0, %v161
    %v164 = vsub.f32 2.0, %v162
    %v165 = vmul.f32 %v159, %v163
    %v166 = vmul.f32 %v160, %v164
    %v167 = vmul.f32 %v150, %v165
    %v168 = vmul.f32 %v152, %v166
    %169 = vst.msk [vmem:[%s4] sm:$0xff] %vm140, %v167
    %170 = vst.msk [vmem:[%s4 + $0x8] sm:$0xff] %vm140, %v168
    %v171 = vld [vmem:[#allocation2] sm:$0xff]
    %v172 = vld [vmem:[#allocation2 + $0x8] sm:$0xff]
    %v173 = vld [vmem:[#allocation2 + $0x10] sm:$0xff]
    %v174 = vld [vmem:[#allocation2 + $0x18] sm:$0xff]
    %v175 = vld [vmem:[#allocation2 + $0x20] sm:$0xff]
    %v176 = vld [vmem:[#allocation2 + $0x28] sm:$0xff]
    %v177 = vld [vmem:[#allocation2 + $0x30] sm:$0xff]
    %v178 = vld [vmem:[#allocation2 + $0x38] sm:$0xff]
    %179 = vmatprep.subr.mxu0 0.0
    %180 = vmatpush1.msra.mxu0 0.0
    %181 = vmatprep.subr.mxu0 0.0
    %182 = vmatpush1.msra.mxu0 0.0
    %183 = vmatprep.subr.mxu0 0.0
    %184 = vmatpush1.msra.mxu0 0.0
    %185 = vmatprep.subr.mxu0 0.0
    %186 = vmatpush1.msra.mxu0 0.0
    %187 = vmatprep.subr.mxu0 0.0
    %188 = vmatpush1.msra.mxu0 0.0
    %189 = vmatprep.subr.mxu0 0.0
    %190 = vmatpush1.msra.mxu0 0.0
    %191 = vmatprep.subr.mxu0 0.0
    %192 = vmatpush1.msra.mxu0 0.0
    %193 = vmatprep.subr.mxu0 0.0
    %194 = vmatpush1.msra.mxu0 0.0
    %195 = vmatprep.subr.mxu0 0.0
    %196 = vmatpush1.msra.mxu0 0.0
    %197 = vmatprep.subr.mxu0 0.0
    %198 = vmatpush1.msra.mxu0 0.0
    %199 = vmatprep.subr.mxu0 0.0
    %200 = vmatpush1.msra.mxu0 0.0
    %201 = vmatprep.subr.mxu0 0.0
    %202 = vmatpush1.msra.mxu0 0.0
    %203 = vmatprep.subr.mxu0 %v178
    %204 = vmatpush1.msra.mxu0 %v177
    %205 = vmatprep.subr.mxu0 %v176
    %206 = vmatpush1.msra.mxu0 %v175
    %207 = vmatprep.subr.mxu0 %v174
    %208 = vmatpush1.msra.mxu0 %v173
    %209 = vmatprep.subr.mxu0 %v172
    %210 = vmatpush1.msra.mxu0 %v171
    %211 = vmatprep.subr.mxu0 0.0
    %212 = vmatpush2.msra.mxu0 0.0
    %213 = vmatprep.subr.mxu0 0.0
    %214 = vmatpush2.msra.mxu0 0.0
    %215 = vmatprep.subr.mxu0 0.0
    %216 = vmatpush2.msra.mxu0 0.0
    %217 = vmatprep.subr.mxu0 0.0
    %218 = vmatpush2.msra.mxu0 0.0
    %219 = vmatprep.subr.mxu0 0.0
    %220 = vmatpush2.msra.mxu0 0.0
    %221 = vmatprep.subr.mxu0 0.0
    %222 = vmatpush2.msra.mxu0 0.0
    %223 = vmatprep.subr.mxu0 0.0
    %224 = vmatpush2.msra.mxu0 0.0
    %225 = vmatprep.subr.mxu0 0.0
    %226 = vmatpush2.msra.mxu0 0.0
    %227 = vmatprep.subr.mxu0 0.0
    %228 = vmatpush2.msra.mxu0 0.0
    %229 = vmatprep.subr.mxu0 0.0
    %230 = vmatpush2.msra.mxu0 0.0
    %231 = vmatprep.subr.mxu0 0.0
    %232 = vmatpush2.msra.mxu0 0.0
    %233 = vmatprep.subr.mxu0 0.0
    %234 = vmatpush2.msra.mxu0 0.0
    %235 = vmatprep.subr.mxu0 0.0
    %236 = vmatpush2.msra.mxu0 0.0
    %237 = vmatprep.subr.mxu0 0.0
    %238 = vmatpush2.msra.mxu0 0.0
    %239 = vmatprep.subr.mxu0 0.0
    %240 = vmatpush2.msra.mxu0 0.0
    %241 = vmatprep.subr.mxu0 0.0
    %242 = vmatpush2.msra.mxu0 0.0
    %243 = vmatprep.mubr.f32.mxu0 0.0
    %244 = vmatmul.mubr.f32.gmra.mxu0 %v60
    %v245 = vpop.f32.mrf.mxu0
    %v246 = vadd.f32 0.0, %v245
    %v247 = vpop.f32.mrf.mxu0
    %v248 = vadd.f32 0.0, %v247
    %249 = vmatprep.mubr.f32.mxu0 0.0
    %250 = vmatmul.mubr.f32.gmra.mxu0 %v63
    %v251 = vpop.f32.mrf.mxu0
    %v252 = vadd.f32 0.0, %v251
    %v253 = vpop.f32.mrf.mxu0
    %v254 = vadd.f32 0.0, %v253
    %255 = vdwg.mxu0
    %256 = vst [vmem:[#allocation7] sm:$0xff] %v246
    %257 = vst [vmem:[#allocation7 + $0x8] sm:$0xff] %v248
    %258 = vst [vmem:[#allocation7 + $0x10] sm:$0xff] %v252
    %259 = vst [vmem:[#allocation7 + $0x18] sm:$0xff] %v254
    %v260 = vld [vmem:[#allocation5] sm:$0xff]
    %v261 = vld [vmem:[#allocation5 + $0x8] sm:$0xff]
    %v262 = vld [vmem:[#allocation5 + $0x10] sm:$0xff]
    %v263 = vld [vmem:[#allocation5 + $0x18] sm:$0xff]
    %v264 = vld [vmem:[#allocation5 + $0x20] sm:$0xff]
    %v265 = vld [vmem:[#allocation5 + $0x28] sm:$0xff]
    %v266 = vld [vmem:[#allocation5 + $0x30] sm:$0xff]
    %v267 = vld [vmem:[#allocation5 + $0x38] sm:$0xff]
    %268 = vmatprep.subr.mxu0 0.0
    %269 = vmatpush1.msra.mxu0 0.0
    %270 = vmatprep.subr.mxu0 0.0
    %271 = vmatpush1.msra.mxu0 0.0
    %272 = vmatprep.subr.mxu0 0.0
    %273 = vmatpush1.msra.mxu0 0.0
    %274 = vmatprep.subr.mxu0 0.0
    %275 = vmatpush1.msra.mxu0 0.0
    %276 = vmatprep.subr.mxu0 0.0
    %277 = vmatpush1.msra.mxu0 0.0
    %278 = vmatprep.subr.mxu0 0.0
    %279 = vmatpush1.msra.mxu0 0.0
    %280 = vmatprep.subr.mxu0 0.0
    %281 = vmatpush1.msra.mxu0 0.0
    %282 = vmatprep.subr.mxu0 0.0
    %283 = vmatpush1.msra.mxu0 0.0
    %284 = vmatprep.subr.mxu0 0.0
    %285 = vmatpush1.msra.mxu0 0.0
    %286 = vmatprep.subr.mxu0 0.0
    %287 = vmatpush1.msra.mxu0 0.0
    %288 = vmatprep.subr.mxu0 0.0
    %289 = vmatpush1.msra.mxu0 0.0
    %290 = vmatprep.subr.mxu0 0.0
    %291 = vmatpush1.msra.mxu0 0.0
    %292 = vmatprep.subr.mxu0 %v267
    %293 = vmatpush1.msra.mxu0 %v266
    %294 = vmatprep.subr.mxu0 %v265
    %295 = vmatpush1.msra.mxu0 %v264
    %296 = vmatprep.subr.mxu0 %v263
    %297 = vmatpush1.msra.mxu0 %v262
    %298 = vmatprep.subr.mxu0 %v261
    %299 = vmatpush1.msra.mxu0 %v260
    %300 = vmatprep.subr.mxu0 0.0
    %301 = vmatpush2.msra.mxu0 0.0
    %302 = vmatprep.subr.mxu0 0.0
    %303 = vmatpush2.msra.mxu0 0.0
    %304 = vmatprep.subr.mxu0 0.0
    %305 = vmatpush2.msra.mxu0 0.0
    %306 = vmatprep.subr.mxu0 0.0
    %307 = vmatpush2.msra.mxu0 0.0
    %308 = vmatprep.subr.mxu0 0.0
    %309 = vmatpush2.msra.mxu0 0.0
    %310 = vmatprep.subr.mxu0 0.0
    %311 = vmatpush2.msra.mxu0 0.0
    %312 = vmatprep.subr.mxu0 0.0
    %313 = vmatpush2.msra.mxu0 0.0
    %314 = vmatprep.subr.mxu0 0.0
    %315 = vmatpush2.msra.mxu0 0.0
    %316 = vmatprep.subr.mxu0 0.0
    %317 = vmatpush2.msra.mxu0 0.0
    %318 = vmatprep.subr.mxu0 0.0
    %319 = vmatpush2.msra.mxu0 0.0
    %320 = vmatprep.subr.mxu0 0.0
    %321 = vmatpush2.msra.mxu0 0.0
    %322 = vmatprep.subr.mxu0 0.0
    %323 = vmatpush2.msra.mxu0 0.0
    %324 = vmatprep.subr.mxu0 0.0
    %325 = vmatpush2.msra.mxu0 0.0
    %326 = vmatprep.subr.mxu0 0.0
    %327 = vmatpush2.msra.mxu0 0.0
    %328 = vmatprep.subr.mxu0 0.0
    %329 = vmatpush2.msra.mxu0 0.0
    %330 = vmatprep.subr.mxu0 0.0
    %331 = vmatpush2.msra.mxu0 0.0
    %332 = vmatprep.mubr.f32.mxu0 0.0
    %333 = vmatmul.mubr.f32.gmra.mxu0 %v60
    %v334 = vpop.f32.mrf.mxu0
    %v335 = vadd.f32 0.0, %v334
    %v336 = vpop.f32.mrf.mxu0
    %v337 = vadd.f32 0.0, %v336
    %338 = vmatprep.mubr.f32.mxu0 0.0
    %339 = vmatmul.mubr.f32.gmra.mxu0 %v63
    %v340 = vpop.f32.mrf.mxu0
    %v341 = vadd.f32 0.0, %v340
    %v342 = vpop.f32.mrf.mxu0
    %v343 = vadd.f32 0.0, %v342
    %344 = vdwg.mxu0
    %v345 = vmin.f32 %v335, 20.0
    %v346 = vmin.f32 %v337, 20.0
    %v347 = vmin.f32 %v341, 20.0
    %v348 = vmin.f32 %v343, 20.0
    %v349 = vmul.f32 %v345, 1.442695
    %v350 = vpow.pop %v349
    %v351 = vmul.f32 %v346, 1.442695
    %v352 = vpow.pop %v351
    %v353 = vmul.f32 %v347, 1.442695
    %v354 = vpow.pop %v353
    %v355 = vmul.f32 %v348, 1.442695
    %v356 = vpow.pop %v355
    %v357 = vadd.f32 %v350, 1.0
    %v358 = vlog2.pop %v357
    %v359 = vmul.f32 %v358, 0.6931472
    %v360 = vmul.f32 -0.5, %v350
    %v361 = vadd.f32 %v360, 1.0
    %v362 = vmul.f32 %v361, %v350
    %v363 = vand.u32 2147483647, %v350
    %vm364 = vcmp.lt.f32.partialorder %v363, 0.0004427343
    %v365 = vsel %vm364, %v362, %v359
    %v366 = vadd.f32 %v352, 1.0
    %v367 = vlog2.pop %v366
    %v368 = vmul.f32 %v367, 0.6931472
    %v369 = vmul.f32 -0.5, %v352
    %v370 = vadd.f32 %v369, 1.0
    %v371 = vmul.f32 %v370, %v352
    %v372 = vand.u32 2147483647, %v352
    %vm373 = vcmp.lt.f32.partialorder %v372, 0.0004427343
    %v374 = vsel %vm373, %v371, %v368
    %v375 = vadd.f32 %v354, 1.0
    %v376 = vlog2.pop %v375
    %v377 = vmul.f32 %v376, 0.6931472
    %v378 = vmul.f32 -0.5, %v354
    %v379 = vadd.f32 %v378, 1.0
    %v380 = vmul.f32 %v379, %v354
    %v381 = vand.u32 2147483647, %v354
    %vm382 = vcmp.lt.f32.partialorder %v381, 0.0004427343
    %v383 = vsel %vm382, %v380, %v377
    %v384 = vadd.f32 %v356, 1.0
    %v385 = vlog2.pop %v384
    %v386 = vmul.f32 %v385, 0.6931472
    %v387 = vmul.f32 -0.5, %v356
    %v388 = vadd.f32 %v387, 1.0
    %v389 = vmul.f32 %v388, %v356
    %v390 = vand.u32 2147483647, %v356
    %vm391 = vcmp.lt.f32.partialorder %v390, 0.0004427343
    %v392 = vsel %vm391, %v389, %v386
    %vm393 = vcmp.gt.f32.partialorder %v335, 20.0
    %vm394 = vcmp.gt.f32.partialorder %v337, 20.0
    %vm395 = vcmp.gt.f32.partialorder %v341, 20.0
    %vm396 = vcmp.gt.f32.partialorder %v343, 20.0
    %v397 = vsel %vm393, %v335, %v365
    %v398 = vsel %vm394, %v337, %v374
    %v399 = vsel %vm395, %v341, %v383
    %v400 = vsel %vm396, %v343, %v392
    %401 = vst [vmem:[#allocation8] sm:$0xff] %v397
    %402 = vst [vmem:[#allocation8 + $0x8] sm:$0xff] %v398
    %403 = vst [vmem:[#allocation8 + $0x10] sm:$0xff] %v399
    %404 = vst [vmem:[#allocation8 + $0x18] sm:$0xff] %v400
    // Predicated region
    $region26: #{tpu_custom_call.1} parent=1 // pred_check
      _
    $region27: #{tpu_custom_call.1} parent=1 // pred_check_branch
      %406 = sbr.rel (0) target = $region29
    $region28: #{tpu_custom_call.1} parent=1 // pred_region
      _
    $region29: #{tpu_custom_call.1} parent=1 // pred_fallthru
      _
    // Predicated region
    $region30: #{tpu_custom_call.1} parent=1 // pred_check
      _
    $region31: #{tpu_custom_call.1} parent=1 // pred_check_branch
      %408 = sbr.rel (0) target = $region33
    $region32: #{tpu_custom_call.1} parent=1 // pred_region
      %s410 = ssub.s32 512, 512
      %411 = vsyncadd [#allocation4], %s410
      %s412 = sshll.u32 [#allocation7], 4
      %s413 = int_to_ptr.vmem [resolvable:$true] %s412
      %418 = dma.vmem_to_hbm [thread:$0]  %s413, 512, %s5, [#allocation4], 256, 256, 16
    $region33: #{tpu_custom_call.1} parent=1 // pred_fallthru
      _
    // Predicated region
    $region34: #{tpu_custom_call.1} parent=1 // pred_check
      _
    $region35: #{tpu_custom_call.1} parent=1 // pred_check_branch
      %420 = sbr.rel (0) target = $region37
    $region36: #{tpu_custom_call.1} parent=1 // pred_region
      %s422 = ssub.s32 512, 512
      %423 = vsyncadd [#allocation9], %s422
      %s424 = sshll.u32 [#allocation8], 4
      %s425 = int_to_ptr.vmem [resolvable:$true] %s424
      %430 = dma.vmem_to_hbm [thread:$0]  %s425, 512, %s6, [#allocation9], 256, 256, 16
    $region37: #{tpu_custom_call.1} parent=1 // pred_fallthru
      _
    // Predicated region
    $region38: #{tpu_custom_call.1} parent=1 // pred_check
      _
    $region39: #{tpu_custom_call.1} parent=1 // pred_check_branch
      %432 = sbr.rel (0) target = $region41
    $region40: #{tpu_custom_call.1} parent=1 // pred_region
      _
    $region41: #{tpu_custom_call.1} parent=1 // pred_fallthru
      _
    // Predicated region
    $region42: #{tpu_custom_call.1} parent=1 // pred_check
      _
    $region43: #{tpu_custom_call.1} parent=1 // pred_check_branch
      %434 = sbr.rel (0) target = $region45
    $region44: #{tpu_custom_call.1} parent=1 // pred_region
      %435 = dma.done [#allocation4], 512
    $region45: #{tpu_custom_call.1} parent=1 // pred_fallthru
      _
    // Predicated region
    $region46: #{tpu_custom_call.1} parent=1 // pred_check
      _
    $region47: #{tpu_custom_call.1} parent=1 // pred_check_branch
      %437 = sbr.rel (0) target = $region49
    $region48: #{tpu_custom_call.1} parent=1 // pred_region
      %438 = dma.done [#allocation9], 512
    $region49: #{tpu_custom_call.1} parent=1 // pred_fallthru
      _
    %439 = vsyncpa [#allocation3], 1
    %440 = vsyncpa [#allocation6], 1
    %441 = vsyncpa [#allocation4], 1
    %442 = vsyncpa [#allocation9], 1

</llo_original>
